<compile_context>
chip_gen: v7x
topology: tpu7x:2x2x1
jax: 0.10.0
libtpu: 0.0.40
codegen_flags: <defaults>
</compile_context>

<pallas_src>
import jax
import jax.numpy as jnp
from jax.experimental import pallas as pl
from jax.experimental.pallas import tpu as pltpu


def highway_kernel(x_ref, w_ref, b_ref, o_ref):
    x = x_ref[...]                                        # (TB, E), bf16
    # Canonical (TB, E) @ (E, 2E) matmul, f32 accumulation on the MXU.
    y = jnp.dot(x, w_ref[...], preferred_element_type=jnp.float32)
    y = y + b_ref[...]                                    # bias (1, 2E) f32

    e = o_ref.shape[-1]
    proj = jnp.maximum(y[:, :e], 0.0)                     # relu branch
    # sigmoid(z) = 1 / (1 + exp(-z)); exp and approx-recip both hit the EUP.
    gate = pl.reciprocal(1.0 + jnp.exp(-y[:, e:]), approx=True)

    xf = x.astype(jnp.float32)
    # gate*proj + (1-gate)*x  ==  x + gate*(proj - x)
    o_ref[...] = (xf + gate * (proj - xf)).astype(o_ref.dtype)


def _resident_spec(shape):
    """Constant-index (VMEM-resident) operand; single-buffered (no re-DMA)."""
    idx = lambda i: (0, 0)
    try:
        return pl.BlockSpec(shape, idx, pipeline_mode=pl.Buffered(1))
    except TypeError:  # pipeline_mode unsupported -> fall back to default
        return pl.BlockSpec(shape, idx)


def highway_forward(x, w_proj, b_proj, w_gate, b_gate, *, block_b=512):
    """x: (B, E); w_*: (E, E) torch Linear.weight layout (out, in); b_*: (E,)."""
    B, E = x.shape
    out_dtype = x.dtype

    # Glue (ideally pre-fused once outside the call): fuse the two Linear
    # layers into a single (E, 2E) operand already oriented for the MXU and
    # drop the matmul operands to bf16 (f32 accumulation inside the kernel).
    mxu_dtype = jnp.bfloat16
    w_fused = jnp.concatenate([w_proj.T, w_gate.T], axis=1).astype(mxu_dtype)   # (E, 2E)
    b_fused = jnp.concatenate([b_proj, b_gate]).reshape(1, 2 * E).astype(jnp.float32)
    x_mxu = x.astype(mxu_dtype)

    # --- batch tile ---------------------------------------------------------
    tb = min(block_b, B)
    if tb < B:
        # MXU-row aligned streamed tile (256 on v6e/v7x, also a mult. of 128).
        tb = (tb // 256) * 256 or (tb // 8) * 8 or 8
    elif B >= 16:
        # One tile would leave a v7x TensorCore idle -> split into >=2 tiles.
        tb = -(-pl.cdiv(B, 2) // 8) * 8
    grid = (pl.cdiv(B, tb),)
    # No explicit padding: Pallas masks the ragged edge tile; garbage rows flow
    # through the epilogue but their stores are discarded.

    # --- explicit VMEM budget ------------------------------------------------
    in_item = jnp.dtype(mxu_dtype).itemsize
    out_item = jnp.dtype(out_dtype).itemsize
    footprint = (
        2 * tb * E * in_item           # x tile (double-buffered)
        + 2 * tb * E * out_item        # out tile (double-buffered)
        + E * (2 * E) * in_item        # resident fused weight (single buffer)
        + (2 * E) * 4                  # resident bias (f32)
        + 4 * tb * (2 * E) * 4         # y + epilogue temporaries (generous f32)
    )
    vmem_limit = int(min(max(2 * footprint, 16 << 20), 64 << 20))

    cost = pl.CostEstimate(
        flops=2 * B * E * (2 * E) + 7 * B * E,
        transcendentals=B * E,
        bytes_accessed=(x_mxu.size * in_item + w_fused.size * in_item
                        + b_fused.size * 4 + B * E * out_item),
    )

    return pl.pallas_call(
        highway_kernel,
        out_shape=jax.ShapeDtypeStruct((B, E), out_dtype),
        grid=grid,
        in_specs=[
            pl.BlockSpec((tb, E), lambda i: (i, 0)),      # x: streamed over batch
            _resident_spec((E, 2 * E)),                   # fused W: resident
            _resident_spec((1, 2 * E)),                   # fused b: resident
        ],
        out_specs=pl.BlockSpec((tb, E), lambda i: (i, 0)),
        compiler_params=pltpu.CompilerParams(
            dimension_semantics=("parallel",),            # megacore over batch
            vmem_limit_bytes=vmem_limit,
        ),
        cost_estimate=cost,
    )(x_mxu, w_fused, b_fused)


def highway_reference(x, w_proj, b_proj, w_gate, b_gate):
    proj = jax.nn.relu(x @ w_proj.T + b_proj)
    gate = jax.nn.sigmoid(x @ w_gate.T + b_gate)
    return gate * proj + (1.0 - gate) * x


if __name__ == "__main__":
    key = jax.random.PRNGKey(0)
    # (batch_size, e_word).  B=24 gives a 2-step grid (tb=16) with a ragged
    # edge tile, exercising the un-padded masking path.
    B, E = 24, 128

    k_x, k_wp, k_bp, k_wg, k_bg = jax.random.split(key, 5)
    x = jax.random.normal(k_x, (B, E), dtype=jnp.float32)
    scale = 1.0 / (E ** 0.5)
    w_proj = jax.random.uniform(k_wp, (E, E), jnp.float32, -scale, scale)
    b_proj = jax.random.uniform(k_bp, (E,), jnp.float32, -scale, scale)
    w_gate = jax.random.uniform(k_wg, (E, E), jnp.float32, -scale, scale)
    b_gate = jax.random.uniform(k_bg, (E,), jnp.float32, -scale, scale)

    out = highway_forward(x, w_proj, b_proj, w_gate, b_gate)
    out = jax.block_until_ready(out)

    ref = highway_reference(x, w_proj, b_proj, w_gate, b_gate)
    assert out.shape == (B, E)
    # bf16 MXU operands -> tolerance reflects input rounding (f32 accumulation).
    assert jnp.allclose(out, ref, atol=5e-2, rtol=5e-2), "mismatch vs reference"

    print("KERNEL_OK")
</pallas_src>

<mosaic_0001>
module attributes {stable_mosaic.version = 11 : i64} {
  func.func @highway_kernel(%arg0: i32, %arg1: memref<16x128xbf16, #tpu.memory_space<vmem>>, %arg2: memref<128x256xbf16, #tpu.memory_space<vmem>>, %arg3: memref<1x256xf32, #tpu.memory_space<vmem>>, %arg4: memref<16x128xf32, #tpu.memory_space<vmem>>) attributes {dimension_semantics = [#tpu.dimension_semantics<parallel>], iteration_bounds = array<i64: 2>, scalar_prefetch = 0 : i64, scratch_operands = 0 : i64, tpu.core_type = #tpu.core_type<tc>, window_params = [{transform_indices = @transform_0, window_bounds = array<i64: 16, 128>}, {pipeline_mode = #tpu.pipeline_mode<synchronous>, transform_indices = @transform_1, window_bounds = array<i64: 128, 256>}, {pipeline_mode = #tpu.pipeline_mode<synchronous>, transform_indices = @transform_2, window_bounds = array<i64: 1, 256>}, {transform_indices = @transform_3, window_bounds = array<i64: 16, 128>}]} {
    %c0 = arith.constant 0 : index
    %c0_0 = arith.constant 0 : index
    %0 = vector.load %arg1[%c0, %c0_0] : memref<16x128xbf16, #tpu.memory_space<vmem>>, vector<16x128xbf16>
    %c0_1 = arith.constant 0 : index
    %c0_2 = arith.constant 0 : index
    %1 = vector.load %arg2[%c0_1, %c0_2] : memref<128x256xbf16, #tpu.memory_space<vmem>>, vector<128x256xbf16>
    %cst = arith.constant dense<0.000000e+00> : vector<16x256xf32>
    %2 = tpu.matmul %0, %1, %cst {dimension_numbers = #tpu.dot_dimension_numbers<[1], [0], [0], [1], [0, 0, 1, 1], [], []>} : vector<16x128xbf16>, vector<128x256xbf16>, vector<16x256xf32> -> vector<16x256xf32>
    %c0_3 = arith.constant 0 : index
    %c0_4 = arith.constant 0 : index
    %3 = vector.load %arg3[%c0_3, %c0_4] : memref<1x256xf32, #tpu.memory_space<vmem>>, vector<1x256xf32>
    %4 = vector.broadcast %3 : vector<1x256xf32> to vector<16x256xf32>
    %5 = arith.addf %2, %4 : vector<16x256xf32>
    %6 = vector.extract_strided_slice %5 {offsets = [0, 0], sizes = [16, 128], strides = [1, 1]} : vector<16x256xf32> to vector<16x128xf32>
    %cst_5 = arith.constant 0.000000e+00 : f32
    %7 = vector.broadcast %cst_5 : f32 to vector<16x128xf32>
    %8 = arith.maximumf %6, %7 : vector<16x128xf32>
    %9 = vector.extract_strided_slice %5 {offsets = [0, 128], sizes = [16, 128], strides = [1, 1]} : vector<16x256xf32> to vector<16x128xf32>
    %cst_6 = arith.constant 0.000000e+00 : f32
    %10 = vector.broadcast %cst_6 : f32 to vector<16x128xf32>
    %11 = arith.subf %10, %9 : vector<16x128xf32>
    %12 = math.exp %11 : vector<16x128xf32>
    %cst_7 = arith.constant 1.000000e+00 : f32
    %13 = vector.broadcast %cst_7 : f32 to vector<16x128xf32>
    %14 = arith.addf %13, %12 : vector<16x128xf32>
    %15 = tpu.reciprocal %14 {approx = true} : vector<16x128xf32> -> vector<16x128xf32>
    %16 = arith.extf %0 : vector<16x128xbf16> to vector<16x128xf32>
    %17 = arith.subf %8, %16 : vector<16x128xf32>
    %18 = arith.mulf %15, %17 : vector<16x128xf32>
    %19 = arith.addf %16, %18 : vector<16x128xf32>
    %c0_8 = arith.constant 0 : index
    %c0_9 = arith.constant 0 : index
    %20 = vector.load %arg4[%c0_8, %c0_9] : memref<16x128xf32, #tpu.memory_space<vmem>>, vector<16x128xf32>
    tpu.vector_store %arg4[%c0_8, %c0_9], %19 {strides = array<i32>} : memref<16x128xf32, #tpu.memory_space<vmem>>, vector<16x128xf32>,
    return
  }
  func.func @transform_0(%arg0: i32) -> (i32, i32) {
    %c0_i32 = arith.constant 0 : i32
    %c0_i32_0 = arith.constant 0 : i32
    return %arg0, %c0_i32 : i32, i32
  }
  func.func @transform_1(%arg0: i32) -> (i32, i32) {
    %c0_i32 = arith.constant 0 : i32
    %c0_i32_0 = arith.constant 0 : i32
    %c0_i32_1 = arith.constant 0 : i32
    return %c0_i32, %c0_i32_0 : i32, i32
  }
  func.func @transform_2(%arg0: i32) -> (i32, i32) {
    %c0_i32 = arith.constant 0 : i32
    %c0_i32_0 = arith.constant 0 : i32
    %c0_i32_1 = arith.constant 0 : i32
    return %c0_i32, %c0_i32_0 : i32, i32
  }
  func.func @transform_3(%arg0: i32) -> (i32, i32) {
    %c0_i32 = arith.constant 0 : i32
    %c0_i32_0 = arith.constant 0 : i32
    return %arg0, %c0_i32 : i32, i32
  }
}

</mosaic_0001>

<llo_original>
// kernel: tpu_custom_call.1
$region0: #{tpu_custom_call.1}
  #allocation0 [shape = 'u32[]', space=smem, size = 0x4, offset = 0x4, fixed_abs, tag = 'smem constant byte address 0x4 - core index']
  #allocation1 [shape = 'u32[144,128]{1,0:T(1,128)}', space=vmem, size = 0x12000, scoped, tag = 'internal scratch']
  %s0 = inlined_call_operand.hbm [shape: bf16[24,128], index: 0, kind: input, shape index: {}]
  %s1 = inlined_call_operand.hbm [shape: bf16[128,256], index: 1, kind: input, shape index: {}]
  %s2 = inlined_call_operand.vmem [shape: f32[1,256], index: 2, kind: input, shape index: {}]
  %s3 = inlined_call_operand.hbm [shape: f32[24,128], index: 3, kind: output, shape index: {}]
  %s4 = sld [smem:[#allocation0]]
  $region53: #{tpu_custom_call.1} parent=0
    _
  %s6 = ssub.s32 1, %s4
  %s7 = scalar_select 0, %s6, %s4
  $region1: #{tpu_custom_call.1} parent=0
    #allocation2 [shape = 'u8[8192]{0}', space=vmem, size = 0x2000, scoped, tag = 'input window, operand 0']
    #allocation3 [shape = 's32[2]{0}', space=sflag, size = 0x8, scoped, tag = 'scoped memory for tpu_custom_call.1']
    #allocation4 [shape = 's32[2]{0}', space=sflag, size = 0x8, scoped, tag = 'scoped memory for tpu_custom_call.1']
    #allocation5 [shape = 'u8[65536]{0}', space=vmem, size = 0x10000, scoped, tag = 'input window, operand 1, single buffered']
    #allocation6 [shape = 's32[1]{0}', space=sflag, size = 0x4, scoped, tag = 'scoped memory for tpu_custom_call.1']
    #allocation7 [shape = 'u8[16384]{0}', space=vmem, size = 0x4000, scoped, tag = 'output window, operand 0']
    %8 = vsyncpa [#allocation3], 0
    %s9 = scalar_lea.sflag [#allocation3], 1
    %10 = vsyncpa %s9, 0
    %11 = vsyncpa [#allocation6], 0
    %12 = vsyncpa [#allocation4], 0
    %s13 = scalar_lea.sflag [#allocation4], 1
    %14 = vsyncpa %s13, 0
    loop: start=0, step=1, limit=4
    $region2: #{tpu_custom_call.1} parent=1 // loop_pre_header
      _
    $region3: #{tpu_custom_call.1} parent=1 // loop_header
      %s16 = sphi 0, %s20
      %p17 = scmp.ge.s32.totalorder %s16, 4
      %s26 = sphi 0, %s28
      %s29 = sphi 0, %s26
      %s30 = sphi 0, %s29
      %s46 = sphi 0, %s30
      %s50 = sphi 0, %s50
      %s52 = sphi 0, %s50
      %s53 = sphi 0, %s52
      %s67 = sphi 0, %s53
      %s71 = sphi 0, %s71
      %s73 = sphi 0, %s71
      %s74 = sphi 0, %s73
      %s88 = sphi 0, %s74
      %s94 = sphi 0, %s96
      %s97 = sphi 0, %s94
      %s98 = sphi 0, %s97
      %s114 = sphi 0, %s98
    $region4: #{tpu_custom_call.1} parent=1 // loop_header_branch
      %19 = sbr.rel (%p17) target = $region8
    $region5: #{tpu_custom_call.1} parent=1 // loop_body
      %s21 = ssub.s32 %s16, 1
      %s22 = ssub.s32 %s16, 2
      %s23 = sadd.s32 %s16, 1
      %s24 = ssub.s32 %s16, %s23
      %p25 = scmp.eq.s32.totalorder %s24, 0
      %s27 = sadd.s32 %s26, 1
      %s28 = scalar_select %p25, %s26, %s27
      %p31 = pneg %p25
      %p32 = scmp.eq.s32.totalorder %s16, 1
      %p33 = por %p31, %p32
      %p34 = scmp.ne.s32.totalorder %s26, %s29
      %p35 = scmp.eq.s32.totalorder %s16, 0
      %p36 = por %p34, %p35
      %p37 = scmp.ne.s32.totalorder %s26, %s29
      %p38 = scmp.eq.s32.totalorder %s21, 1
      %p39 = por %p37, %p38
      %p40 = scmp.ne.s32.totalorder %s29, %s30
      %p41 = scmp.eq.s32.totalorder %s21, 0
      %p42 = por %p40, %p41
      %p43 = scmp.ne.s32.totalorder %s29, %s30
      %p44 = scmp.eq.s32.totalorder %s22, 1
      %p45 = por %p43, %p44
      %p47 = scmp.ne.s32.totalorder %s30, %s46
      %p48 = scmp.eq.s32.totalorder %s22, 0
      %p49 = por %p47, %p48
      %s51 = sadd.s32 %s50, 1
      %p54 = scmp.eq.s32.totalorder %s16, 1
      %p55 = scmp.ne.s32.totalorder %s50, %s52
      %p56 = scmp.eq.s32.totalorder %s16, 0
      %p57 = por %p55, %p56
      %p58 = scmp.ne.s32.totalorder %s50, %s52
      %p59 = scmp.eq.s32.totalorder %s21, 1
      %p60 = por %p58, %p59
      %p61 = scmp.ne.s32.totalorder %s52, %s53
      %p62 = scmp.eq.s32.totalorder %s21, 0
      %p63 = por %p61, %p62
      %p64 = scmp.ne.s32.totalorder %s52, %s53
      %p65 = scmp.eq.s32.totalorder %s22, 1
      %p66 = por %p64, %p65
      %p68 = scmp.ne.s32.totalorder %s53, %s67
      %p69 = scmp.eq.s32.totalorder %s22, 0
      %p70 = por %p68, %p69
      %s72 = sadd.s32 %s71, 1
      %p75 = scmp.eq.s32.totalorder %s16, 1
      %p76 = scmp.ne.s32.totalorder %s71, %s73
      %p77 = scmp.eq.s32.totalorder %s16, 0
      %p78 = por %p76, %p77
      %p79 = scmp.ne.s32.totalorder %s71, %s73
      %p80 = scmp.eq.s32.totalorder %s21, 1
      %p81 = por %p79, %p80
      %p82 = scmp.ne.s32.totalorder %s73, %s74
      %p83 = scmp.eq.s32.totalorder %s21, 0
      %p84 = por %p82, %p83
      %p85 = scmp.ne.s32.totalorder %s73, %s74
      %p86 = scmp.eq.s32.totalorder %s22, 1
      %p87 = por %p85, %p86
      %p89 = scmp.ne.s32.totalorder %s74, %s88
      %p90 = scmp.eq.s32.totalorder %s22, 0
      %p91 = por %p89, %p90
      %s92 = ssub.s32 %s16, %s23
      %p93 = scmp.eq.s32.totalorder %s92, 0
      %s95 = sadd.s32 %s94, 1
      %s96 = scalar_select %p93, %s94, %s95
      %p99 = pneg %p93
      %p100 = scmp.eq.s32.totalorder %s16, 1
      %p101 = por %p99, %p100
      %p102 = scmp.ne.s32.totalorder %s94, %s97
      %p103 = scmp.eq.s32.totalorder %s16, 0
      %p104 = por %p102, %p103
      %p105 = scmp.ne.s32.totalorder %s94, %s97
      %p106 = scmp.eq.s32.totalorder %s21, 1
      %p107 = por %p105, %p106
      %p108 = scmp.ne.s32.totalorder %s97, %s98
      %p109 = scmp.eq.s32.totalorder %s21, 0
      %p110 = por %p108, %p109
      %p111 = scmp.ne.s32.totalorder %s97, %s98
      %p112 = scmp.eq.s32.totalorder %s22, 1
      %p113 = por %p111, %p112
      %p115 = scmp.ne.s32.totalorder %s98, %s114
      %p116 = scmp.eq.s32.totalorder %s22, 0
      %p117 = por %p115, %p116
      %p118 = scmp.le.s32.totalorder 1, %s16
      %p119 = scmp.lt.s32.totalorder %s16, 3
      %p120 = pnand %p118, %p119
      %p121 = pneg %p120
      // Predicated region
      $region9: #{tpu_custom_call.1} parent=5 // pred_check
        _
      $region10: #{tpu_custom_call.1} parent=5 // pred_check_branch
        %123 = sbr.rel (%p120) target = $region12
      $region11: #{tpu_custom_call.1} parent=5 // pred_region
        %s124 = ssub.s32 %s16, 1
        // Predicated region
        $region13: #{tpu_custom_call.1} parent=11 // pred_check
          %p125 = pneg %p63
        $region14: #{tpu_custom_call.1} parent=11 // pred_check_branch
          %127 = sbr.rel (%p125) target = $region16
        $region15: #{tpu_custom_call.1} parent=11 // pred_region
          %s129 = ssub.s32 2048, 2048
          %130 = vsyncadd [#allocation6], %s129
          %s131 = sshll.u32 [#allocation5], 4
          %s132 = int_to_ptr.vmem [resolvable:$true] %s131
          %137 = dma.hbm_to_vmem [thread:$0]  %s1, 2048, %s132, [#allocation6], 128, 128, 8
        $region16: #{tpu_custom_call.1} parent=11 // pred_fallthru
          _
        // Predicated region
        $region17: #{tpu_custom_call.1} parent=11 // pred_check
          %p138 = pneg %p84
        $region18: #{tpu_custom_call.1} parent=11 // pred_check_branch
          %140 = sbr.rel (%p138) target = $region20
        $region19: #{tpu_custom_call.1} parent=11 // pred_region
          _
        $region20: #{tpu_custom_call.1} parent=11 // pred_fallthru
          _
      $region12: #{tpu_custom_call.1} parent=5 // pred_fallthru
        _
      %p141 = scmp.lt.s32.totalorder %s16, 2
      // Predicated region
      $region21: #{tpu_custom_call.1} parent=5 // pred_check
        %p142 = pneg %p141
      $region22: #{tpu_custom_call.1} parent=5 // pred_check_branch
        %144 = sbr.rel (%p142) target = $region24
      $region23: #{tpu_custom_call.1} parent=5 // pred_region
        // Predicated region
        $region25: #{tpu_custom_call.1} parent=23 // pred_check
          %p145 = pneg %p36
        $region26: #{tpu_custom_call.1} parent=23 // pred_check_branch
          %147 = sbr.rel (%p145) target = $region28
        $region27: #{tpu_custom_call.1} parent=23 // pred_region
          %s148 = sand.u32 %s26, 1
          %s149 = scalar_lea.sflag [#allocation3], %s148
          %s150 = sand.u32 %s26, 1
          %s151 = smul.addr %s150, 8
          %s152 = scalar_lea.vmem [#allocation2], %s151
          %s153 = smul.u32 2, %s16
          %s154 = ssub.s32 3, %s153
          %p155 = scmp.lt.s32.totalorder %s154, 2
          %s156 = scalar_select %p155, %s154, 2
          %s157 = smul.u32 64, %s156
          %s159 = ssub.s32 128, %s157
          %160 = vsyncadd %s149, %s159
          %p161 = scmp.ne.s32.totalorder 0, %s157
          %s162 = smul.addr %s153, 64
          %s163 = scalar_lea.hbm %s0, %s162
          %s164 = smul.u32 4, %s156
          %s165 = sshll.u32 %s152, 4
          %s166 = int_to_ptr.vmem [resolvable:$true] %s165
          %s167 = sshll.u32 %s164, 4
          %171 = dma.hbm_to_vmem [thread:$0]  (%p161), %s163, %s167, %s166, %s149, 64, 64, 4
        $region28: #{tpu_custom_call.1} parent=23 // pred_fallthru
          _
      $region24: #{tpu_custom_call.1} parent=5 // pred_fallthru
        _
      %p172 = scmp.le.s32.totalorder 1, %s16
      %p173 = scmp.lt.s32.totalorder %s16, 3
      %p174 = pnand %p172, %p173
      %p175 = pneg %p174
      // Predicated region
      $region29: #{tpu_custom_call.1} parent=5 // pred_check
        _
      $region30: #{tpu_custom_call.1} parent=5 // pred_check_branch
        %177 = sbr.rel (%p174) target = $region32
      $region31: #{tpu_custom_call.1} parent=5 // pred_region
        %s178 = ssub.s32 %s16, 1
        %s179 = sand.u32 %s29, 1
        %s180 = scalar_lea.sflag [#allocation3], %s179
        %s181 = sand.u32 %s29, 1
        %s182 = smul.addr %s181, 8
        %s183 = scalar_lea.vmem [#allocation2], %s182
        // Predicated region
        $region33: #{tpu_custom_call.1} parent=31 // pred_check
          %p184 = pneg %p42
        $region34: #{tpu_custom_call.1} parent=31 // pred_check_branch
          %186 = sbr.rel (%p184) target = $region36
        $region35: #{tpu_custom_call.1} parent=31 // pred_region
          %187 = dma.done %s180, 128
        $region36: #{tpu_custom_call.1} parent=31 // pred_fallthru
          _
        // Predicated region
        $region37: #{tpu_custom_call.1} parent=31 // pred_check
          %p188 = pneg %p63
        $region38: #{tpu_custom_call.1} parent=31 // pred_check_branch
          %190 = sbr.rel (%p188) target = $region40
        $region39: #{tpu_custom_call.1} parent=31 // pred_region
          %191 = dma.done [#allocation6], 2048
        $region40: #{tpu_custom_call.1} parent=31 // pred_fallthru
          _
        %s192 = sand.u32 %s29, 1
        %s193 = scalar_lea.sflag [#allocation3], %s192
        %s194 = sand.u32 %s29, 1
        %s195 = smul.addr %s194, 8
        %s196 = scalar_lea.vmem [#allocation2], %s195
        %p197 = pneg %p42
        %p198 = pneg %p39
        %p199 = pneg %p63
        %p200 = pneg %p60
        %p201 = pneg %p84
        %p202 = pneg %p81
        %p203 = pneg %p110
        %p204 = pneg %p107
        %s205 = sand.u32 %s97, 1
        %s206 = scalar_lea.sflag [#allocation4], %s205
        %s207 = sand.u32 %s97, 1
        %s208 = smul.addr %s207, 16
        %s209 = scalar_lea.vmem [#allocation7], %s208
        %s210 = smul.u32 2, %s21
        %s211 = ssub.s32 3, %s210
        %p212 = scmp.lt.s32.totalorder %s211, 2
        %s213 = scalar_select %p212, %s211, 2
        %s214 = smul.u32 64, %s213
        %s215 = smul.u32 2, %s21
        %s216 = ssub.s32 3, %s215
        %p217 = scmp.lt.s32.totalorder %s216, 2
        %s218 = scalar_select %p217, %s216, 2
        %s219 = smul.u32 128, %s218
        %v221 = vld [vmem:[%s183] sm:$0xf]
        %v222 = vld [vmem:[%s183 + $0x4] sm:$0xf]
        %v223 = vld [vmem:[#allocation5] sm:$0xff]
        %v224 = vld [vmem:[#allocation5 + $0x8] sm:$0xff]
        %v225 = vld [vmem:[#allocation5 + $0x10] sm:$0xff]
        %v226 = vld [vmem:[#allocation5 + $0x18] sm:$0xff]
        %v227 = vld [vmem:[#allocation5 + $0x20] sm:$0xff]
        %v228 = vld [vmem:[#allocation5 + $0x28] sm:$0xff]
        %v229 = vld [vmem:[#allocation5 + $0x30] sm:$0xff]
        %v230 = vld [vmem:[#allocation5 + $0x38] sm:$0xff]
        %v231 = vld [vmem:[#allocation5 + $0x40] sm:$0xff]
        %v232 = vld [vmem:[#allocation5 + $0x48] sm:$0xff]
        %v233 = vld [vmem:[#allocation5 + $0x50] sm:$0xff]
        %v234 = vld [vmem:[#allocation5 + $0x58] sm:$0xff]
        %v235 = vld [vmem:[#allocation5 + $0x60] sm:$0xff]
        %v236 = vld [vmem:[#allocation5 + $0x68] sm:$0xff]
        %v237 = vld [vmem:[#allocation5 + $0x70] sm:$0xff]
        %v238 = vld [vmem:[#allocation5 + $0x78] sm:$0xff]
        %v239 = vld [vmem:[%s2] sm:$0x3]
        %v241 = vlaneseq
        %v242 = vshrl.u32 %v241, 7
        %v243 = vsub.s32 0, %v242
        %v244 = vrot.slane %v239, %v243
        %v245 = vlaneseq
        %v246 = vshrl.u32 %v245, 7
        %v247 = vsub.s32 1, %v246
        %v248 = vrot.slane %v239, %v247
        %v253 = vunpack.c.l.b16 %v221
        %v254 = vunpack.c.l.b16 %v222
        %v255 = vpack.c.b16 %v254, %v253
        %v273 = vunpack.c.l.b16 %v223
        %v274 = vunpack.c.h.b16 %v223
        %v275 = vunpack.c.l.b16 %v224
        %v276 = vunpack.c.h.b16 %v224
        %v277 = vunpack.c.l.b16 %v225
        %v278 = vunpack.c.h.b16 %v225
        %v279 = vunpack.c.l.b16 %v226
        %v280 = vunpack.c.h.b16 %v226
        %v281 = vunpack.c.l.b16 %v227
        %v282 = vunpack.c.h.b16 %v227
        %v283 = vunpack.c.l.b16 %v228
        %v284 = vunpack.c.h.b16 %v228
        %v285 = vunpack.c.l.b16 %v229
        %v286 = vunpack.c.h.b16 %v229
        %v287 = vunpack.c.l.b16 %v230
        %v288 = vunpack.c.h.b16 %v230
        %v289 = vunpack.c.l.b16 %v231
        %v290 = vunpack.c.h.b16 %v231
        %v291 = vunpack.c.l.b16 %v232
        %v292 = vunpack.c.h.b16 %v232
        %v293 = vunpack.c.l.b16 %v233
        %v294 = vunpack.c.h.b16 %v233
        %v295 = vunpack.c.l.b16 %v234
        %v296 = vunpack.c.h.b16 %v234
        %v297 = vunpack.c.l.b16 %v235
        %v298 = vunpack.c.h.b16 %v235
        %v299 = vunpack.c.l.b16 %v236
        %v300 = vunpack.c.h.b16 %v236
        %v301 = vunpack.c.l.b16 %v237
        %v302 = vunpack.c.h.b16 %v237
        %v303 = vunpack.c.l.b16 %v238
        %v304 = vunpack.c.h.b16 %v238
        %v305 = vpack.c.b16 %v275, %v273
        %v306 = vpack.c.b16 %v276, %v274
        %v307 = vpack.c.b16 %v279, %v277
        %v308 = vpack.c.b16 %v280, %v278
        %v309 = vpack.c.b16 %v283, %v281
        %v310 = vpack.c.b16 %v284, %v282
        %v311 = vpack.c.b16 %v287, %v285
        %v312 = vpack.c.b16 %v288, %v286
        %v313 = vpack.c.b16 %v291, %v289
        %v314 = vpack.c.b16 %v292, %v290
        %v315 = vpack.c.b16 %v295, %v293
        %v316 = vpack.c.b16 %v296, %v294
        %v317 = vpack.c.b16 %v299, %v297
        %v318 = vpack.c.b16 %v300, %v298
        %v319 = vpack.c.b16 %v303, %v301
        %v320 = vpack.c.b16 %v304, %v302
        %337 = vmatprep.subr.bf16.mxu0 %v306
        %338 = vmatpush1.bf16.msra.mxu0 %v305
        %339 = vmatprep.subr.bf16.mxu0 %v308
        %340 = vmatpush1.bf16.msra.mxu0 %v307
        %341 = vmatprep.subr.bf16.mxu0 %v310
        %342 = vmatpush1.bf16.msra.mxu0 %v309
        %343 = vmatprep.subr.bf16.mxu0 %v312
        %344 = vmatpush1.bf16.msra.mxu0 %v311
        %345 = vmatprep.subr.bf16.mxu0 %v314
        %346 = vmatpush1.bf16.msra.mxu0 %v313
        %347 = vmatprep.subr.bf16.mxu0 %v316
        %348 = vmatpush1.bf16.msra.mxu0 %v315
        %349 = vmatprep.subr.bf16.mxu0 %v318
        %350 = vmatpush1.bf16.msra.mxu0 %v317
        %351 = vmatprep.subr.bf16.mxu0 %v320
        %352 = vmatpush1.bf16.msra.mxu0 %v319
        %353 = vmatprep.subr.bf16.mxu0 0
        %354 = vmatpush1.bf16.msra.mxu0 0
        %355 = vmatprep.subr.bf16.mxu0 0
        %356 = vmatpush1.bf16.msra.mxu0 0
        %357 = vmatprep.subr.bf16.mxu0 0
        %358 = vmatpush1.bf16.msra.mxu0 0
        %359 = vmatprep.subr.bf16.mxu0 0
        %360 = vmatpush1.bf16.msra.mxu0 0
        %361 = vmatprep.subr.bf16.mxu0 0
        %362 = vmatpush1.bf16.msra.mxu0 0
        %363 = vmatprep.subr.bf16.mxu0 0
        %364 = vmatpush1.bf16.msra.mxu0 0
        %365 = vmatprep.subr.bf16.mxu0 0
        %366 = vmatpush1.bf16.msra.mxu0 0
        %367 = vmatprep.subr.bf16.mxu0 0
        %368 = vmatpush1.bf16.msra.mxu0 0
        %369 = vmatprep.mubr.bf16.mxu0 0
        %370 = vmatmul.mubr.bf16.gmra.mrb[0].mxu0 %v255
        %v371 = vpop.f32.mrb[0].mxu0
        %v372 = vadd.f32 %v244, %v371
        %v373 = vpop.f32.mrb[0].mxu0
        %v374 = vadd.f32 %v248, %v373
        %v375 = vpop.f32.mrb[0].mxu0
        %v376 = vadd.f32 %v244, %v375
        %v377 = vpop.f32.mrb[0].mxu0
        %v378 = vadd.f32 %v248, %v377
        %379 = vdwg.mxu0
        %v380 = vmax.f32 %v372, 0.0
        %v381 = vmax.f32 %v376, 0.0
        %v382 = vsub.f32 0.0, %v374
        %v383 = vsub.f32 0.0, %v378
        %v384 = vmul.f32 %v382, 1.442695
        %v385 = vpow.pop %v384
        %v386 = vmul.f32 %v383, 1.442695
        %v387 = vpow.pop %v386
        %v388 = vadd.f32 %v385, 1.0
        %v389 = vadd.f32 %v387, 1.0
        %v390 = vrcp.pop %v388
        %v391 = vrcp.pop %v389
        %v392 = vunpack.c.l.bf16 %v221
        %v393 = vunpack.c.l.bf16 %v222
        %v394 = vsub.f32 %v380, %v392
        %v395 = vsub.f32 %v381, %v393
        %v396 = vmul.f32 %v390, %v394
        %v397 = vmul.f32 %v391, %v395
        %v398 = vadd.f32 %v392, %v396
        %v399 = vadd.f32 %v393, %v397
        %400 = vst [vmem:[%s209] sm:$0xff] %v398
        %401 = vst [vmem:[%s209 + $0x8] sm:$0xff] %v399
        %s402 = sand.u32 %s97, 1
        %s403 = scalar_lea.sflag [#allocation4], %s402
        %s404 = sand.u32 %s97, 1
        %s405 = smul.addr %s404, 16
        %s406 = scalar_lea.vmem [#allocation7], %s405
        // Predicated region
        $region41: #{tpu_custom_call.1} parent=31 // pred_check
          %p407 = pneg %p107
        $region42: #{tpu_custom_call.1} parent=31 // pred_check_branch
          %409 = sbr.rel (%p407) target = $region44
        $region43: #{tpu_custom_call.1} parent=31 // pred_region
          %s410 = smul.u32 2, %s21
          %s411 = ssub.s32 3, %s410
          %p412 = scmp.lt.s32.totalorder %s411, 2
          %s413 = scalar_select %p412, %s411, 2
          %s414 = smul.u32 128, %s413
          %s416 = ssub.s32 256, %s414
          %417 = vsyncadd %s403, %s416
          %p418 = scmp.ne.s32.totalorder 0, %s414
          %s419 = smul.addr %s410, 128
          %s420 = scalar_lea.hbm %s3, %s419
          %s421 = smul.u32 8, %s413
          %s422 = sshll.u32 %s406, 4
          %s423 = int_to_ptr.vmem [resolvable:$true] %s422
          %s424 = sshll.u32 %s421, 4
          %428 = dma.vmem_to_hbm [thread:$0]  (%p418), %s423, %s424, %s420, %s403, 128, 128, 8
        $region44: #{tpu_custom_call.1} parent=31 // pred_fallthru
          _
      $region32: #{tpu_custom_call.1} parent=5 // pred_fallthru
        _
      %p429 = scmp.le.s32.totalorder 2, %s16
      // Predicated region
      $region45: #{tpu_custom_call.1} parent=5 // pred_check
        %p430 = pneg %p429
      $region46: #{tpu_custom_call.1} parent=5 // pred_check_branch
        %432 = sbr.rel (%p430) target = $region48
      $region47: #{tpu_custom_call.1} parent=5 // pred_region
        %s433 = ssub.s32 %s16, 2
        // Predicated region
        $region49: #{tpu_custom_call.1} parent=47 // pred_check
          %p434 = pneg %p113
        $region50: #{tpu_custom_call.1} parent=47 // pred_check_branch
          %436 = sbr.rel (%p434) target = $region52
        $region51: #{tpu_custom_call.1} parent=47 // pred_region
          %s437 = sand.u32 %s98, 1
          %s438 = scalar_lea.sflag [#allocation4], %s437
          %s439 = sand.u32 %s98, 1
          %s440 = smul.addr %s439, 16
          %s441 = scalar_lea.vmem [#allocation7], %s440
          %442 = dma.done %s438, 256
        $region52: #{tpu_custom_call.1} parent=47 // pred_fallthru
          _
      $region48: #{tpu_custom_call.1} parent=5 // pred_fallthru
        _
    $region6: #{tpu_custom_call.1} parent=1 // loop_footer
      %s20 = sadd.s32 1, %s16
    $region7: #{tpu_custom_call.1} parent=1 // loop_footer_branch
      %15 = sbr.rel target = $region3
    $region8: #{tpu_custom_call.1} parent=1 // loop_exit
      _
    %443 = vsyncpa [#allocation3], 1
    %s444 = scalar_lea.sflag [#allocation3], 1
    %445 = vsyncpa %s444, 1
    %446 = vsyncpa [#allocation6], 1
    %447 = vsyncpa [#allocation4], 1
    %s448 = scalar_lea.sflag [#allocation4], 1
    %449 = vsyncpa %s448, 1

</llo_original>
